<compile_context>
chip_gen: v7x
topology: tpu7x:2x2x1
jax: 0.10.0
libtpu: 0.0.40
codegen_flags: <defaults>
</compile_context>

<pallas_src>
import functools

import jax
import jax.numpy as jnp
from jax.experimental import pallas as pl
from jax.experimental.pallas import tpu as pltpu

HIDDEN = 128
FC1_OUT = 256
GATE_LANES = 3 * HIDDEN                  # [i, g, o] (forget gate dropped)
SLAB_LANES = GATE_LANES + FC1_OUT        # 640
B_TILE = 128                             # batch tile (fills MXU rows on v5e; fine on v6e/v7x)


def _round_up(x, m):
    return ((x + m - 1) // m) * m


# ----------------------------------------------------------------------------
# Kernel
# ----------------------------------------------------------------------------
def critic_kernel(x_ref, w_ref, f32_ref, out_ref):
    # x_ref  : (tile_b, k_pad)      bf16   batch of concat(state, action)
    # w_ref  : (k_pad, 640)         bf16   [ W_ih^T (i,g,o) | W_fc1^T ]
    # f32_ref: (2, 640)             f32    row0 = [b_gates | b_fc1]
    #                                      row1 = [w_fc2 row | b_fc2 | 0...]
    x = x_ref[...]
    w_ih = w_ref[:, :GATE_LANES]                     # (k_pad, 384) bf16
    w1 = w_ref[:HIDDEN, GATE_LANES:]                 # (128, 256)   bf16
    b_g = f32_ref[0:1, :GATE_LANES]                  # (1, 384)
    b1 = f32_ref[0:1, GATE_LANES:]                   # (1, 256)
    w2 = f32_ref[1:2, :FC1_OUT]                      # (1, 256)
    b2 = f32_ref[1:2, FC1_OUT:FC1_OUT + 1]           # (1, 1)

    # --- LSTM single step (h0 = c0 = 0), forget gate dropped ---
    gates = jnp.dot(x, w_ih, preferred_element_type=jnp.float32) + b_g
    i_g = jax.nn.sigmoid(gates[:, :HIDDEN])
    g_g = jnp.tanh(gates[:, HIDDEN:2 * HIDDEN])
    o_g = jax.nn.sigmoid(gates[:, 2 * HIDDEN:])
    h = o_g * jnp.tanh(i_g * g_g)                    # (tile_b, 128) f32

    # --- fc1 + relu (bf16 MXU operands, f32 accumulate) ---
    z1 = jnp.dot(h.astype(jnp.bfloat16), w1,
                 preferred_element_type=jnp.float32) + b1
    z1 = jnp.maximum(z1, 0.0)

    # --- fc2 as VPU multiply + lane reduce (avoids a lane-width-1 matmul) ---
    out_ref[...] = jnp.sum(z1 * w2, axis=-1, keepdims=True) + b2


# ----------------------------------------------------------------------------
# Parameter construction / packing
# ----------------------------------------------------------------------------
def pack_critic_params(w_ih, b_ih, b_hh, w1, b1, w2, b2, input_size):
    """Pack PyTorch-layout params into two slabs for the kernel."""
    k_pad = _round_up(max(input_size, HIDDEN), 128)

    # Drop forget-gate rows (PyTorch gate order i, f, g, o); keep [i, g, o].
    w_keep = jnp.concatenate([w_ih[:HIDDEN], w_ih[2 * HIDDEN:]], axis=0)   # (3H, in)
    b_sum = b_ih + b_hh
    b_keep = jnp.concatenate([b_sum[:HIDDEN], b_sum[2 * HIDDEN:]], axis=0)  # (3H,)

    wih_t = jnp.zeros((k_pad, GATE_LANES), jnp.float32).at[:input_size].set(w_keep.T)
    w1_t = jnp.zeros((k_pad, FC1_OUT), jnp.float32).at[:HIDDEN].set(w1.T)
    w_slab = jnp.concatenate([wih_t, w1_t], axis=1).astype(jnp.bfloat16)    # (k_pad, 640)

    row0 = jnp.concatenate([b_keep, b1], axis=0)                            # (640,)
    row1 = (jnp.zeros((SLAB_LANES,), jnp.float32)
            .at[:FC1_OUT].set(w2.reshape(-1))
            .at[FC1_OUT].set(b2.reshape(-1)[0]))
    f32_slab = jnp.stack([row0, row1], axis=0)                              # (2, 640)

    return dict(w_slab=w_slab, f32_slab=f32_slab,
                k_pad=k_pad, input_size=input_size)


def make_critic_params(key, input_size):
    """Deterministic init mirroring the PyTorch module's shapes/inits."""
    ks = jax.random.split(key, 7)
    std = 1.0 / jnp.sqrt(float(HIDDEN))

    w_ih = jax.random.uniform(ks[0], (4 * HIDDEN, input_size),
                              minval=-std, maxval=std, dtype=jnp.float32)
    b_ih = jax.random.uniform(ks[1], (4 * HIDDEN,), minval=-std, maxval=std,
                              dtype=jnp.float32)
    b_hh = jax.random.uniform(ks[2], (4 * HIDDEN,), minval=-std, maxval=std,
                              dtype=jnp.float32)

    def xavier_uniform(k, fan_out, fan_in):
        limit = jnp.sqrt(6.0 / (fan_in + fan_out))
        return jax.random.uniform(k, (fan_out, fan_in), minval=-limit,
                                  maxval=limit, dtype=jnp.float32)

    w1 = xavier_uniform(ks[3], FC1_OUT, HIDDEN)
    b1 = jax.random.uniform(ks[4], (FC1_OUT,),
                            minval=-std, maxval=std, dtype=jnp.float32)
    w2 = xavier_uniform(ks[5], 1, FC1_OUT)
    b2 = jax.random.uniform(ks[6], (1,),
                            minval=-1.0 / jnp.sqrt(float(FC1_OUT)),
                            maxval=1.0 / jnp.sqrt(float(FC1_OUT)),
                            dtype=jnp.float32)

    return pack_critic_params(w_ih, b_ih, b_hh, w1, b1, w2, b2, input_size)


# ----------------------------------------------------------------------------
# Wrappers
# ----------------------------------------------------------------------------
def _run_critic(x_f32, params, block_b=B_TILE):
    """x_f32: (B, input_size) f32 -> (B, 1) f32 values."""
    B, in_dim = x_f32.shape
    assert in_dim == params["input_size"]
    k_pad = params["k_pad"]

    # Pad features to the packed K and batch to a tile multiple.
    x_p = jnp.pad(x_f32, ((0, 0), (0, k_pad - in_dim)))
    tile_b = block_b if B > block_b else max(8, _round_up(B, 8))
    b_pad = _round_up(B, tile_b)
    x_p = jnp.pad(x_p, ((0, b_pad - B), (0, 0))).astype(jnp.bfloat16)

    out = pl.pallas_call(
        critic_kernel,
        out_shape=jax.ShapeDtypeStruct((b_pad, 1), jnp.float32),
        grid_spec=pltpu.PrefetchScalarGridSpec(
            num_scalar_prefetch=0,
            grid=(b_pad // tile_b,),
            in_specs=[
                pl.BlockSpec((tile_b, k_pad), lambda b: (b, 0)),
                pl.BlockSpec((k_pad, SLAB_LANES), lambda b: (0, 0)),
                pl.BlockSpec((2, SLAB_LANES), lambda b: (0, 0)),
            ],
            out_specs=pl.BlockSpec((tile_b, 1), lambda b: (b, 0)),
        ),
        compiler_params=pltpu.CompilerParams(
            dimension_semantics=("parallel",)),
    )(x_p, params["w_slab"], params["f32_slab"])
    return out[:B]


def critic_forward(state, action, params):
    """Single-sample forward identical to the PyTorch module (returns shape (1,))."""
    x = jnp.concatenate(
        [jnp.asarray(state, jnp.float32).reshape(-1),
         jnp.asarray(action, jnp.float32).reshape(-1)], axis=0).reshape(1, -1)
    return _run_critic(x, params).reshape(1)


def critic_forward_batched(states, actions, params):
    """Batched forward over B (state, action) pairs -> (B, 1)."""
    B = states.shape[0]
    x = jnp.concatenate(
        [jnp.asarray(states, jnp.float32).reshape(B, -1),
         jnp.asarray(actions, jnp.float32).reshape(B, -1)], axis=1)
    return _run_critic(x, params)


# ----------------------------------------------------------------------------
# Pure-JAX reference (same math / same packed params, no Pallas)
# ----------------------------------------------------------------------------
def critic_reference(x_f32, params):
    k_pad = params["k_pad"]
    B, in_dim = x_f32.shape
    xp = jnp.pad(x_f32, ((0, 0), (0, k_pad - in_dim))).astype(jnp.bfloat16)
    w = params["w_slab"]
    f = params["f32_slab"]
    w_ih = w[:, :GATE_LANES]
    w1 = w[:HIDDEN, GATE_LANES:]
    b_g = f[0:1, :GATE_LANES]
    b1 = f[0:1, GATE_LANES:]
    w2 = f[1:2, :FC1_OUT]
    b2 = f[1:2, FC1_OUT:FC1_OUT + 1]

    gates = jnp.dot(xp, w_ih, preferred_element_type=jnp.float32) + b_g
    i_g = jax.nn.sigmoid(gates[:, :HIDDEN])
    g_g = jnp.tanh(gates[:, HIDDEN:2 * HIDDEN])
    o_g = jax.nn.sigmoid(gates[:, 2 * HIDDEN:])
    h = o_g * jnp.tanh(i_g * g_g)
    z1 = jnp.maximum(jnp.dot(h.astype(jnp.bfloat16), w1,
                             preferred_element_type=jnp.float32) + b1, 0.0)
    return jnp.sum(z1 * w2, axis=-1, keepdims=True) + b2


if __name__ == "__main__":
    # Small, self-consistent problem sizes (same formula as the PyTorch module).
    ma_aims_num, node_num, user_num = 2, 3, 2
    input_size = (ma_aims_num * node_num + 3 * 2 * node_num
                  + user_num * (node_num * node_num + node_num)
                  + user_num * (4 + ma_aims_num)
                  + node_num * 3 + ma_aims_num * node_num)   # = 75

    key = jax.random.PRNGKey(0)
    k_params, k_state, k_action = jax.random.split(key, 3)
    params = make_critic_params(k_params, input_size)

    state_dim = input_size - ma_aims_num * node_num
    state = jax.random.normal(k_state, (state_dim,), jnp.float32)
    action = jax.random.normal(k_action, (ma_aims_num, node_num), jnp.float32)

    # ---- single-sample path (matches the PyTorch forward signature) ----
    value = critic_forward(state, action, params)
    jax.block_until_ready(value)
    assert value.shape == (1,)

    x1 = jnp.concatenate([state, action.reshape(-1)]).reshape(1, -1)
    ref1 = critic_reference(x1, params).reshape(1)
    assert jnp.allclose(value, ref1, atol=1e-3, rtol=1e-3)

    # ---- batched path (B = 256 -> two parallel grid steps of 128) ----
    B = 256
    kb1, kb2 = jax.random.split(jax.random.PRNGKey(1))
    states = jax.random.normal(kb1, (B, state_dim), jnp.float32).at[0].set(state)
    actions = jax.random.normal(kb2, (B, ma_aims_num, node_num),
                                jnp.float32).at[0].set(action)

    values = critic_forward_batched(states, actions, params)
    jax.block_until_ready(values)
    assert values.shape == (B, 1)

    ref_b = critic_reference(
        jnp.concatenate([states, actions.reshape(B, -1)], axis=1), params)
    assert jnp.allclose(values, ref_b, atol=1e-3, rtol=1e-3)
    assert jnp.allclose(values[0], value, atol=1e-3, rtol=1e-3)

    print("KERNEL_OK")
</pallas_src>

<mosaic_0001>
module attributes {stable_mosaic.version = 11 : i64} {
  func.func @critic_kernel(%arg0: i32, %arg1: memref<8x128xbf16, #tpu.memory_space<vmem>>, %arg2: memref<128x640xbf16, #tpu.memory_space<vmem>>, %arg3: memref<2x640xf32, #tpu.memory_space<vmem>>, %arg4: memref<8x1xf32, #tpu.memory_space<vmem>>) attributes {dimension_semantics = [#tpu.dimension_semantics<parallel>], iteration_bounds = array<i64: 1>, scalar_prefetch = 0 : i64, scratch_operands = 0 : i64, tpu.core_type = #tpu.core_type<tc>, window_params = [{transform_indices = @transform_0, window_bounds = array<i64: 8, 128>}, {pipeline_mode = #tpu.pipeline_mode<synchronous>, transform_indices = @transform_1, window_bounds = array<i64: 128, 640>}, {pipeline_mode = #tpu.pipeline_mode<synchronous>, transform_indices = @transform_2, window_bounds = array<i64: 2, 640>}, {transform_indices = @transform_3, window_bounds = array<i64: 8, 1>}]} {
    %c0 = arith.constant 0 : index
    %c0_0 = arith.constant 0 : index
    %0 = vector.load %arg1[%c0, %c0_0] : memref<8x128xbf16, #tpu.memory_space<vmem>>, vector<8x128xbf16>
    %c0_1 = arith.constant 0 : index
    %c0_2 = arith.constant 0 : index
    %1 = vector.load %arg2[%c0_1, %c0_2] : memref<128x640xbf16, #tpu.memory_space<vmem>>, vector<128x384xbf16>
    %c0_3 = arith.constant 0 : index
    %c384 = arith.constant 384 : index
    %2 = vector.load %arg2[%c0_3, %c384] : memref<128x640xbf16, #tpu.memory_space<vmem>>, vector<128x256xbf16>
    %c0_4 = arith.constant 0 : index
    %c0_5 = arith.constant 0 : index
    %3 = vector.load %arg3[%c0_4, %c0_5] : memref<2x640xf32, #tpu.memory_space<vmem>>, vector<1x384xf32>
    %c0_6 = arith.constant 0 : index
    %c384_7 = arith.constant 384 : index
    %4 = vector.load %arg3[%c0_6, %c384_7] : memref<2x640xf32, #tpu.memory_space<vmem>>, vector<1x256xf32>
    %c1 = arith.constant 1 : index
    %c0_8 = arith.constant 0 : index
    %5 = vector.load %arg3[%c1, %c0_8] : memref<2x640xf32, #tpu.memory_space<vmem>>, vector<1x256xf32>
    %c1_9 = arith.constant 1 : index
    %c256 = arith.constant 256 : index
    %6 = vector.load %arg3[%c1_9, %c256] : memref<2x640xf32, #tpu.memory_space<vmem>>, vector<1x1xf32>
    %cst = arith.constant dense<0.000000e+00> : vector<8x384xf32>
    %7 = tpu.matmul %0, %1, %cst {dimension_numbers = #tpu.dot_dimension_numbers<[1], [0], [0], [1], [0, 0, 1, 1], [], []>} : vector<8x128xbf16>, vector<128x384xbf16>, vector<8x384xf32> -> vector<8x384xf32>
    %8 = vector.broadcast %3 : vector<1x384xf32> to vector<8x384xf32>
    %9 = arith.addf %7, %8 : vector<8x384xf32>
    %10 = vector.extract_strided_slice %9 {offsets = [0, 0], sizes = [8, 128], strides = [1, 1]} : vector<8x384xf32> to vector<8x128xf32>
    %11 = arith.negf %10 : vector<8x128xf32>
    %12 = math.exp %11 : vector<8x128xf32>
    %cst_10 = arith.constant 1.000000e+00 : f32
    %13 = vector.broadcast %cst_10 : f32 to vector<8x128xf32>
    %14 = arith.addf %13, %12 : vector<8x128xf32>
    %15 = arith.divf %13, %14 : vector<8x128xf32>
    %16 = vector.extract_strided_slice %9 {offsets = [0, 128], sizes = [8, 128], strides = [1, 1]} : vector<8x384xf32> to vector<8x128xf32>
    %17 = math.tanh %16 : vector<8x128xf32>
    %18 = vector.extract_strided_slice %9 {offsets = [0, 256], sizes = [8, 128], strides = [1, 1]} : vector<8x384xf32> to vector<8x128xf32>
    %19 = arith.negf %18 : vector<8x128xf32>
    %20 = math.exp %19 : vector<8x128xf32>
    %cst_11 = arith.constant 1.000000e+00 : f32
    %21 = vector.broadcast %cst_11 : f32 to vector<8x128xf32>
    %22 = arith.addf %21, %20 : vector<8x128xf32>
    %23 = arith.divf %21, %22 : vector<8x128xf32>
    %24 = arith.mulf %15, %17 : vector<8x128xf32>
    %25 = math.tanh %24 : vector<8x128xf32>
    %26 = arith.mulf %23, %25 : vector<8x128xf32>
    %27 = arith.truncf %26 : vector<8x128xf32> to vector<8x128xbf16>
    %cst_12 = arith.constant dense<0.000000e+00> : vector<8x256xf32>
    %28 = tpu.matmul %27, %2, %cst_12 {dimension_numbers = #tpu.dot_dimension_numbers<[1], [0], [0], [1], [0, 0, 1, 1], [], []>} : vector<8x128xbf16>, vector<128x256xbf16>, vector<8x256xf32> -> vector<8x256xf32>
    %29 = vector.broadcast %4 : vector<1x256xf32> to vector<8x256xf32>
    %30 = arith.addf %28, %29 : vector<8x256xf32>
    %cst_13 = arith.constant 0.000000e+00 : f32
    %31 = vector.broadcast %cst_13 : f32 to vector<8x256xf32>
    %32 = arith.maximumf %30, %31 : vector<8x256xf32>
    %33 = vector.broadcast %5 : vector<1x256xf32> to vector<8x256xf32>
    %34 = arith.mulf %32, %33 : vector<8x256xf32>
    %cst_14 = arith.constant dense<0.000000e+00> : vector<8xf32>
    %35 = vector.multi_reduction <add>, %34, %cst_14 [1] : vector<8x256xf32> to vector<8xf32>
    %36 = vector.shape_cast %35 : vector<8xf32> to vector<8x1xf32>
    %37 = vector.broadcast %6 : vector<1x1xf32> to vector<8x1xf32>
    %38 = arith.addf %36, %37 : vector<8x1xf32>
    %c0_15 = arith.constant 0 : index
    %c0_16 = arith.constant 0 : index
    %39 = vector.load %arg4[%c0_15, %c0_16] : memref<8x1xf32, #tpu.memory_space<vmem>>, vector<8x1xf32>
    tpu.vector_store %arg4[%c0_15, %c0_16], %38 {strides = array<i32>} : memref<8x1xf32, #tpu.memory_space<vmem>>, vector<8x1xf32>,
    return
  }
  func.func @transform_0(%arg0: i32) -> (i32, i32) {
    %c0_i32 = arith.constant 0 : i32
    %c0_i32_0 = arith.constant 0 : i32
    return %arg0, %c0_i32 : i32, i32
  }
  func.func @transform_1(%arg0: i32) -> (i32, i32) {
    %c0_i32 = arith.constant 0 : i32
    %c0_i32_0 = arith.constant 0 : i32
    %c0_i32_1 = arith.constant 0 : i32
    return %c0_i32, %c0_i32_0 : i32, i32
  }
  func.func @transform_2(%arg0: i32) -> (i32, i32) {
    %c0_i32 = arith.constant 0 : i32
    %c0_i32_0 = arith.constant 0 : i32
    %c0_i32_1 = arith.constant 0 : i32
    return %c0_i32, %c0_i32_0 : i32, i32
  }
  func.func @transform_3(%arg0: i32) -> (i32, i32) {
    %c0_i32 = arith.constant 0 : i32
    %c0_i32_0 = arith.constant 0 : i32
    return %arg0, %c0_i32 : i32, i32
  }
}

</mosaic_0001>

<llo_original>
// kernel: tpu_custom_call.1
$region0: #{tpu_custom_call.1}
  #allocation0 [shape = 'u32[]', space=smem, size = 0x4, offset = 0x4, fixed_abs, tag = 'smem constant byte address 0x4 - core index']
  #allocation1 [shape = 'u32[144,128]{1,0:T(1,128)}', space=vmem, size = 0x12000, scoped, tag = 'internal scratch']
  %s0 = inlined_call_operand.hbm [shape: bf16[8,128], index: 0, kind: input, shape index: {}]
  %s1 = inlined_call_operand.hbm [shape: bf16[128,640], index: 1, kind: input, shape index: {}]
  %s2 = inlined_call_operand.hbm [shape: f32[2,640], index: 2, kind: input, shape index: {}]
  %s3 = inlined_call_operand.vmem [shape: f32[8,1], index: 3, kind: output, shape index: {}]
  %s4 = sld [smem:[#allocation0]]
  $region34: #{tpu_custom_call.1} parent=0
    _
  %s6 = ssub.s32 1, %s4
  %s7 = scalar_select 0, %s6, %s4
  $region1: #{tpu_custom_call.1} parent=0
    #allocation2 [shape = 'u8[2048]{0}', space=vmem, size = 0x800, scoped, tag = 'input window, operand 0, single buffered']
    #allocation3 [shape = 's32[1]{0}', space=sflag, size = 0x4, scoped, tag = 'scoped memory for tpu_custom_call.1']
    #allocation4 [shape = 'u8[163840]{0}', space=vmem, size = 0x28000, scoped, tag = 'input window, operand 1, single buffered']
    #allocation5 [shape = 's32[1]{0}', space=sflag, size = 0x4, scoped, tag = 'scoped memory for tpu_custom_call.1']
    #allocation6 [shape = 'u8[5120]{0}', space=vmem, size = 0x1400, scoped, tag = 'input window, operand 2, single buffered']
    %8 = vsyncpa [#allocation3], 0
    %9 = vsyncpa [#allocation5], 0
    // Predicated region
    $region2: #{tpu_custom_call.1} parent=1 // pred_check
      _
    $region3: #{tpu_custom_call.1} parent=1 // pred_check_branch
      %11 = sbr.rel (0) target = $region5
    $region4: #{tpu_custom_call.1} parent=1 // pred_region
      %s13 = ssub.s32 64, 64
      %14 = vsyncadd [#allocation3], %s13
      %s16 = sshll.u32 [#allocation2], 4
      %s17 = int_to_ptr.vmem [resolvable:$true] %s16
      %19 = dma.hbm_to_vmem [thread:$0]  %s0, 64, %s17, [#allocation3]
    $region5: #{tpu_custom_call.1} parent=1 // pred_fallthru
      _
    // Predicated region
    $region6: #{tpu_custom_call.1} parent=1 // pred_check
      _
    $region7: #{tpu_custom_call.1} parent=1 // pred_check_branch
      %21 = sbr.rel (0) target = $region9
    $region8: #{tpu_custom_call.1} parent=1 // pred_region
      %s23 = ssub.s32 5120, 5120
      %24 = vsyncadd [#allocation5], %s23
      %s25 = sshll.u32 [#allocation4], 4
      %s26 = int_to_ptr.vmem [resolvable:$true] %s25
      %31 = dma.hbm_to_vmem [thread:$0]  %s1, 5120, %s26, [#allocation5], 320, 320, 20
    $region9: #{tpu_custom_call.1} parent=1 // pred_fallthru
      _
    // Predicated region
    $region10: #{tpu_custom_call.1} parent=1 // pred_check
      _
    $region11: #{tpu_custom_call.1} parent=1 // pred_check_branch
      %33 = sbr.rel (0) target = $region13
    $region12: #{tpu_custom_call.1} parent=1 // pred_region
      %s35 = ssub.s32 160, 160
      %36 = vsyncadd [#allocation5], %s35
      %s38 = sshll.u32 [#allocation6], 4
      %s39 = int_to_ptr.vmem [resolvable:$true] %s38
      %41 = dma.hbm_to_vmem [thread:$0]  %s2, 160, %s39, [#allocation5]
    $region13: #{tpu_custom_call.1} parent=1 // pred_fallthru
      _
    // Predicated region
    $region14: #{tpu_custom_call.1} parent=1 // pred_check
      _
    $region15: #{tpu_custom_call.1} parent=1 // pred_check_branch
      %43 = sbr.rel (0) target = $region17
    $region16: #{tpu_custom_call.1} parent=1 // pred_region
      %44 = dma.done [#allocation3], 64
    $region17: #{tpu_custom_call.1} parent=1 // pred_fallthru
      _
    // Predicated region
    $region18: #{tpu_custom_call.1} parent=1 // pred_check
      _
    $region19: #{tpu_custom_call.1} parent=1 // pred_check_branch
      %46 = sbr.rel (0) target = $region21
    $region20: #{tpu_custom_call.1} parent=1 // pred_region
      %47 = dma.done [#allocation5], 5120
    $region21: #{tpu_custom_call.1} parent=1 // pred_fallthru
      _
    // Predicated region
    $region22: #{tpu_custom_call.1} parent=1 // pred_check
      _
    $region23: #{tpu_custom_call.1} parent=1 // pred_check_branch
      %49 = sbr.rel (0) target = $region25
    $region24: #{tpu_custom_call.1} parent=1 // pred_region
      %50 = dma.done [#allocation5], 160
    $region25: #{tpu_custom_call.1} parent=1 // pred_fallthru
      _
    %v52 = vld [vmem:[#allocation2] sm:$0xf]
    %v53 = vld [vmem:[#allocation4] sm:$0xff]
    %v54 = vld [vmem:[#allocation4 + $0x8] sm:$0xf]
    %v55 = vld [vmem:[#allocation4 + $0x14] sm:$0xff]
    %v56 = vld [vmem:[#allocation4 + $0x1c] sm:$0xf]
    %v57 = vld [vmem:[#allocation4 + $0x28] sm:$0xff]
    %v58 = vld [vmem:[#allocation4 + $0x30] sm:$0xf]
    %v59 = vld [vmem:[#allocation4 + $0x3c] sm:$0xff]
    %v60 = vld [vmem:[#allocation4 + $0x44] sm:$0xf]
    %v61 = vld [vmem:[#allocation4 + $0x50] sm:$0xff]
    %v62 = vld [vmem:[#allocation4 + $0x58] sm:$0xf]
    %v63 = vld [vmem:[#allocation4 + $0x64] sm:$0xff]
    %v64 = vld [vmem:[#allocation4 + $0x6c] sm:$0xf]
    %v65 = vld [vmem:[#allocation4 + $0x78] sm:$0xff]
    %v66 = vld [vmem:[#allocation4 + $0x80] sm:$0xf]
    %v67 = vld [vmem:[#allocation4 + $0x8c] sm:$0xff]
    %v68 = vld [vmem:[#allocation4 + $0x94] sm:$0xf]
    %v69 = vld [vmem:[#allocation4 + $0xa0] sm:$0xff]
    %v70 = vld [vmem:[#allocation4 + $0xa8] sm:$0xf]
    %v71 = vld [vmem:[#allocation4 + $0xb4] sm:$0xff]
    %v72 = vld [vmem:[#allocation4 + $0xbc] sm:$0xf]
    %v73 = vld [vmem:[#allocation4 + $0xc8] sm:$0xff]
    %v74 = vld [vmem:[#allocation4 + $0xd0] sm:$0xf]
    %v75 = vld [vmem:[#allocation4 + $0xdc] sm:$0xff]
    %v76 = vld [vmem:[#allocation4 + $0xe4] sm:$0xf]
    %v77 = vld [vmem:[#allocation4 + $0xf0] sm:$0xff]
    %v78 = vld [vmem:[#allocation4 + $0xf8] sm:$0xf]
    %v79 = vld [vmem:[#allocation4 + $0x104] sm:$0xff]
    %v80 = vld [vmem:[#allocation4 + $0x10c] sm:$0xf]
    %v81 = vld [vmem:[#allocation4 + $0x118] sm:$0xff]
    %v82 = vld [vmem:[#allocation4 + $0x120] sm:$0xf]
    %v83 = vld [vmem:[#allocation4 + $0x12c] sm:$0xff]
    %v84 = vld [vmem:[#allocation4 + $0x134] sm:$0xf]
    %v85 = vld [vmem:[#allocation4 + $0xc] sm:$0xff]
    %v86 = vld [vmem:[#allocation4 + $0x20] sm:$0xff]
    %v87 = vld [vmem:[#allocation4 + $0x34] sm:$0xff]
    %v88 = vld [vmem:[#allocation4 + $0x48] sm:$0xff]
    %v89 = vld [vmem:[#allocation4 + $0x5c] sm:$0xff]
    %v90 = vld [vmem:[#allocation4 + $0x70] sm:$0xff]
    %v91 = vld [vmem:[#allocation4 + $0x84] sm:$0xff]
    %v92 = vld [vmem:[#allocation4 + $0x98] sm:$0xff]
    %v93 = vld [vmem:[#allocation4 + $0xac] sm:$0xff]
    %v94 = vld [vmem:[#allocation4 + $0xc0] sm:$0xff]
    %v95 = vld [vmem:[#allocation4 + $0xd4] sm:$0xff]
    %v96 = vld [vmem:[#allocation4 + $0xe8] sm:$0xff]
    %v97 = vld [vmem:[#allocation4 + $0xfc] sm:$0xff]
    %v98 = vld [vmem:[#allocation4 + $0x110] sm:$0xff]
    %v99 = vld [vmem:[#allocation4 + $0x124] sm:$0xff]
    %v100 = vld [vmem:[#allocation4 + $0x138] sm:$0xff]
    %v101 = vld [vmem:[#allocation6] ss:$2 sm:$0x7]
    %s102 = scalar_lea.vmem [#allocation6], 6
    %v103 = vld [vmem:[%s102] ss:$2 sm:$0x3]
    %s104 = scalar_lea.vmem [#allocation6], 1
    %v105 = vld [vmem:[%s104] ss:$2 sm:$0x3]
    %v106 = vld [vmem:[#allocation6 + $0x5] sm:$0x1]
    %v108 = vlaneseq
    %v109 = vshrl.u32 %v108, 7
    %v110 = vsub.s32 0, %v109
    %v111 = vrot.slane %v101, %v110
    %v112 = vlaneseq
    %v113 = vshrl.u32 %v112, 7
    %v114 = vsub.s32 1, %v113
    %v115 = vrot.slane %v101, %v114
    %v116 = vlaneseq
    %v117 = vshrl.u32 %v116, 7
    %v118 = vsub.s32 2, %v117
    %v119 = vrot.slane %v101, %v118
    %v155 = vunpack.c.l.b16 %v53
    %v156 = vunpack.c.h.b16 %v53
    %v157 = vunpack.c.l.b16 %v54
    %v158 = vunpack.c.l.b16 %v55
    %v159 = vunpack.c.h.b16 %v55
    %v160 = vunpack.c.l.b16 %v56
    %v161 = vunpack.c.l.b16 %v57
    %v162 = vunpack.c.h.b16 %v57
    %v163 = vunpack.c.l.b16 %v58
    %v164 = vunpack.c.l.b16 %v59
    %v165 = vunpack.c.h.b16 %v59
    %v166 = vunpack.c.l.b16 %v60
    %v167 = vunpack.c.l.b16 %v61
    %v168 = vunpack.c.h.b16 %v61
    %v169 = vunpack.c.l.b16 %v62
    %v170 = vunpack.c.l.b16 %v63
    %v171 = vunpack.c.h.b16 %v63
    %v172 = vunpack.c.l.b16 %v64
    %v173 = vunpack.c.l.b16 %v65
    %v174 = vunpack.c.h.b16 %v65
    %v175 = vunpack.c.l.b16 %v66
    %v176 = vunpack.c.l.b16 %v67
    %v177 = vunpack.c.h.b16 %v67
    %v178 = vunpack.c.l.b16 %v68
    %v179 = vunpack.c.l.b16 %v69
    %v180 = vunpack.c.h.b16 %v69
    %v181 = vunpack.c.l.b16 %v70
    %v182 = vunpack.c.l.b16 %v71
    %v183 = vunpack.c.h.b16 %v71
    %v184 = vunpack.c.l.b16 %v72
    %v185 = vunpack.c.l.b16 %v73
    %v186 = vunpack.c.h.b16 %v73
    %v187 = vunpack.c.l.b16 %v74
    %v188 = vunpack.c.l.b16 %v75
    %v189 = vunpack.c.h.b16 %v75
    %v190 = vunpack.c.l.b16 %v76
    %v191 = vunpack.c.l.b16 %v77
    %v192 = vunpack.c.h.b16 %v77
    %v193 = vunpack.c.l.b16 %v78
    %v194 = vunpack.c.l.b16 %v79
    %v195 = vunpack.c.h.b16 %v79
    %v196 = vunpack.c.l.b16 %v80
    %v197 = vunpack.c.l.b16 %v81
    %v198 = vunpack.c.h.b16 %v81
    %v199 = vunpack.c.l.b16 %v82
    %v200 = vunpack.c.l.b16 %v83
    %v201 = vunpack.c.h.b16 %v83
    %v202 = vunpack.c.l.b16 %v84
    %v203 = vpack.c.b16 %v158, %v155
    %v204 = vpack.c.b16 %v159, %v156
    %v205 = vpack.c.b16 %v160, %v157
    %v206 = vpack.c.b16 %v164, %v161
    %v207 = vpack.c.b16 %v165, %v162
    %v208 = vpack.c.b16 %v166, %v163
    %v209 = vpack.c.b16 %v170, %v167
    %v210 = vpack.c.b16 %v171, %v168
    %v211 = vpack.c.b16 %v172, %v169
    %v212 = vpack.c.b16 %v176, %v173
    %v213 = vpack.c.b16 %v177, %v174
    %v214 = vpack.c.b16 %v178, %v175
    %v215 = vpack.c.b16 %v182, %v179
    %v216 = vpack.c.b16 %v183, %v180
    %v217 = vpack.c.b16 %v184, %v181
    %v218 = vpack.c.b16 %v188, %v185
    %v219 = vpack.c.b16 %v189, %v186
    %v220 = vpack.c.b16 %v190, %v187
    %v221 = vpack.c.b16 %v194, %v191
    %v222 = vpack.c.b16 %v195, %v192
    %v223 = vpack.c.b16 %v196, %v193
    %v224 = vpack.c.b16 %v200, %v197
    %v225 = vpack.c.b16 %v201, %v198
    %v226 = vpack.c.b16 %v202, %v199
    %251 = vmatprep.subr.bf16.mxu0 %v204
    %252 = vmatpush1.bf16.msra.mxu0 %v203
    %253 = vmatprep.subr.bf16.mxu0 %v207
    %254 = vmatpush1.bf16.msra.mxu0 %v206
    %255 = vmatprep.subr.bf16.mxu0 %v210
    %256 = vmatpush1.bf16.msra.mxu0 %v209
    %257 = vmatprep.subr.bf16.mxu0 %v213
    %258 = vmatpush1.bf16.msra.mxu0 %v212
    %259 = vmatprep.subr.bf16.mxu0 %v216
    %260 = vmatpush1.bf16.msra.mxu0 %v215
    %261 = vmatprep.subr.bf16.mxu0 %v219
    %262 = vmatpush1.bf16.msra.mxu0 %v218
    %263 = vmatprep.subr.bf16.mxu0 %v222
    %264 = vmatpush1.bf16.msra.mxu0 %v221
    %265 = vmatprep.subr.bf16.mxu0 %v225
    %266 = vmatpush1.bf16.msra.mxu0 %v224
    %267 = vmatprep.subr.bf16.mxu0 0
    %268 = vmatpush1.bf16.msra.mxu0 0
    %269 = vmatprep.subr.bf16.mxu0 0
    %270 = vmatpush1.bf16.msra.mxu0 0
    %271 = vmatprep.subr.bf16.mxu0 0
    %272 = vmatpush1.bf16.msra.mxu0 0
    %273 = vmatprep.subr.bf16.mxu0 0
    %274 = vmatpush1.bf16.msra.mxu0 0
    %275 = vmatprep.subr.bf16.mxu0 0
    %276 = vmatpush1.bf16.msra.mxu0 0
    %277 = vmatprep.subr.bf16.mxu0 0
    %278 = vmatpush1.bf16.msra.mxu0 0
    %279 = vmatprep.subr.bf16.mxu0 0
    %280 = vmatpush1.bf16.msra.mxu0 0
    %281 = vmatprep.subr.bf16.mxu0 0
    %282 = vmatpush1.bf16.msra.mxu0 0
    %283 = vmatprep.mubr.bf16.mxu0 0
    %284 = vmatmul.mubr.bf16.gmra.mrb[0].mxu0 %v52
    %v285 = vpop.f32.mrb[0].mxu0
    %v286 = vadd.f32 %v111, %v285
    %v287 = vpop.f32.mrb[0].mxu0
    %v288 = vadd.f32 %v115, %v287
    %v289 = vpop.f32.mrb[0].mxu0
    %v290 = vpop.f32.mrb[0].mxu0
    %291 = vdwg.mxu0
    %292 = vmatprep.subr.bf16.mxu0 0
    %293 = vmatpush1.bf16.msra.mxu0 %v205
    %294 = vmatprep.subr.bf16.mxu0 0
    %295 = vmatpush1.bf16.msra.mxu0 %v208
    %296 = vmatprep.subr.bf16.mxu0 0
    %297 = vmatpush1.bf16.msra.mxu0 %v211
    %298 = vmatprep.subr.bf16.mxu0 0
    %299 = vmatpush1.bf16.msra.mxu0 %v214
    %300 = vmatprep.subr.bf16.mxu0 0
    %301 = vmatpush1.bf16.msra.mxu0 %v217
    %302 = vmatprep.subr.bf16.mxu0 0
    %303 = vmatpush1.bf16.msra.mxu0 %v220
    %304 = vmatprep.subr.bf16.mxu0 0
    %305 = vmatpush1.bf16.msra.mxu0 %v223
    %306 = vmatprep.subr.bf16.mxu0 0
    %307 = vmatpush1.bf16.msra.mxu0 %v226
    %308 = vmatprep.subr.bf16.mxu0 0
    %309 = vmatpush1.bf16.msra.mxu0 0
    %310 = vmatprep.subr.bf16.mxu0 0
    %311 = vmatpush1.bf16.msra.mxu0 0
    %312 = vmatprep.subr.bf16.mxu0 0
    %313 = vmatpush1.bf16.msra.mxu0 0
    %314 = vmatprep.subr.bf16.mxu0 0
    %315 = vmatpush1.bf16.msra.mxu0 0
    %316 = vmatprep.subr.bf16.mxu0 0
    %317 = vmatpush1.bf16.msra.mxu0 0
    %318 = vmatprep.subr.bf16.mxu0 0
    %319 = vmatpush1.bf16.msra.mxu0 0
    %320 = vmatprep.subr.bf16.mxu0 0
    %321 = vmatpush1.bf16.msra.mxu0 0
    %322 = vmatprep.subr.bf16.mxu0 0
    %323 = vmatpush1.bf16.msra.mxu0 0
    %324 = vmatprep.mubr.bf16.mxu0 0
    %325 = vmatmul.mubr.bf16.gmra.mrb[0].mxu0 %v52
    %v326 = vpop.f32.mrb[0].mxu0
    %v327 = vadd.f32 %v119, %v326
    %v328 = vpop.f32.mrb[0].mxu0
    %v329 = vpop.f32.mrb[0].mxu0
    %v330 = vpop.f32.mrb[0].mxu0
    %331 = vdwg.mxu0
    %v332 = vxor.u32 %v286, 2147483648
    %v333 = vmul.f32 %v332, 1.442695
    %v334 = vpow.pop %v333
    %v335 = vadd.f32 %v334, 1.0
    %v336 = vrcp.pop %v335
    %v337 = vmul.f32 1.0, %v336
    %v338 = vtanh.pop %v288
    %v339 = vxor.u32 %v327, 2147483648
    %v340 = vmul.f32 %v339, 1.442695
    %v341 = vpow.pop %v340
    %v342 = vadd.f32 %v341, 1.0
    %v343 = vrcp.pop %v342
    %v344 = vmul.f32 1.0, %v343
    %v345 = vmul.f32 %v337, %v338
    %v346 = vtanh.pop %v345
    %v347 = vmul.f32 %v344, %v346
    %v348 = vpack.c.bf16 %v347, %v347
    %v350 = vlaneseq
    %v351 = vshrl.u32 %v350, 7
    %v352 = vsub.s32 0, %v351
    %v353 = vrot.slane %v103, %v352
    %v354 = vlaneseq
    %v355 = vshrl.u32 %v354, 7
    %v356 = vsub.s32 1, %v355
    %v357 = vrot.slane %v103, %v356
    %v376 = vunpack.c.l.b16 %v85
    %v377 = vunpack.c.h.b16 %v85
    %v378 = vunpack.c.l.b16 %v86
    %v379 = vunpack.c.h.b16 %v86
    %v380 = vunpack.c.l.b16 %v87
    %v381 = vunpack.c.h.b16 %v87
    %v382 = vunpack.c.l.b16 %v88
    %v383 = vunpack.c.h.b16 %v88
    %v384 = vunpack.c.l.b16 %v89
    %v385 = vunpack.c.h.b16 %v89
    %v386 = vunpack.c.l.b16 %v90
    %v387 = vunpack.c.h.b16 %v90
    %v388 = vunpack.c.l.b16 %v91
    %v389 = vunpack.c.h.b16 %v91
    %v390 = vunpack.c.l.b16 %v92
    %v391 = vunpack.c.h.b16 %v92
    %v392 = vunpack.c.l.b16 %v93
    %v393 = vunpack.c.h.b16 %v93
    %v394 = vunpack.c.l.b16 %v94
    %v395 = vunpack.c.h.b16 %v94
    %v396 = vunpack.c.l.b16 %v95
    %v397 = vunpack.c.h.b16 %v95
    %v398 = vunpack.c.l.b16 %v96
    %v399 = vunpack.c.h.b16 %v96
    %v400 = vunpack.c.l.b16 %v97
    %v401 = vunpack.c.h.b16 %v97
    %v402 = vunpack.c.l.b16 %v98
    %v403 = vunpack.c.h.b16 %v98
    %v404 = vunpack.c.l.b16 %v99
    %v405 = vunpack.c.h.b16 %v99
    %v406 = vunpack.c.l.b16 %v100
    %v407 = vunpack.c.h.b16 %v100
    %v408 = vpack.c.b16 %v378, %v376
    %v409 = vpack.c.b16 %v379, %v377
    %v410 = vpack.c.b16 %v382, %v380
    %v411 = vpack.c.b16 %v383, %v381
    %v412 = vpack.c.b16 %v386, %v384
    %v413 = vpack.c.b16 %v387, %v385
    %v414 = vpack.c.b16 %v390, %v388
    %v415 = vpack.c.b16 %v391, %v389
    %v416 = vpack.c.b16 %v394, %v392
    %v417 = vpack.c.b16 %v395, %v393
    %v418 = vpack.c.b16 %v398, %v396
    %v419 = vpack.c.b16 %v399, %v397
    %v420 = vpack.c.b16 %v402, %v400
    %v421 = vpack.c.b16 %v403, %v401
    %v422 = vpack.c.b16 %v406, %v404
    %v423 = vpack.c.b16 %v407, %v405
    %440 = vmatprep.subr.bf16.mxu0 %v409
    %441 = vmatpush1.bf16.msra.mxu0 %v408
    %442 = vmatprep.subr.bf16.mxu0 %v411
    %443 = vmatpush1.bf16.msra.mxu0 %v410
    %444 = vmatprep.subr.bf16.mxu0 %v413
    %445 = vmatpush1.bf16.msra.mxu0 %v412
    %446 = vmatprep.subr.bf16.mxu0 %v415
    %447 = vmatpush1.bf16.msra.mxu0 %v414
    %448 = vmatprep.subr.bf16.mxu0 %v417
    %449 = vmatpush1.bf16.msra.mxu0 %v416
    %450 = vmatprep.subr.bf16.mxu0 %v419
    %451 = vmatpush1.bf16.msra.mxu0 %v418
    %452 = vmatprep.subr.bf16.mxu0 %v421
    %453 = vmatpush1.bf16.msra.mxu0 %v420
    %454 = vmatprep.subr.bf16.mxu0 %v423
    %455 = vmatpush1.bf16.msra.mxu0 %v422
    %456 = vmatprep.subr.bf16.mxu0 0
    %457 = vmatpush1.bf16.msra.mxu0 0
    %458 = vmatprep.subr.bf16.mxu0 0
    %459 = vmatpush1.bf16.msra.mxu0 0
    %460 = vmatprep.subr.bf16.mxu0 0
    %461 = vmatpush1.bf16.msra.mxu0 0
    %462 = vmatprep.subr.bf16.mxu0 0
    %463 = vmatpush1.bf16.msra.mxu0 0
    %464 = vmatprep.subr.bf16.mxu0 0
    %465 = vmatpush1.bf16.msra.mxu0 0
    %466 = vmatprep.subr.bf16.mxu0 0
    %467 = vmatpush1.bf16.msra.mxu0 0
    %468 = vmatprep.subr.bf16.mxu0 0
    %469 = vmatpush1.bf16.msra.mxu0 0
    %470 = vmatprep.subr.bf16.mxu0 0
    %471 = vmatpush1.bf16.msra.mxu0 0
    %472 = vmatprep.mubr.bf16.mxu0 0
    %473 = vmatmul.mubr.bf16.gmra.mrb[0].mxu0 %v348
    %v474 = vpop.f32.mrb[0].mxu0
    %v475 = vadd.f32 %v353, %v474
    %v476 = vpop.f32.mrb[0].mxu0
    %v477 = vadd.f32 %v357, %v476
    %v478 = vpop.f32.mrb[0].mxu0
    %v479 = vpop.f32.mrb[0].mxu0
    %480 = vdwg.mxu0
    %v481 = vmax.f32 %v475, 0.0
    %v482 = vmax.f32 %v477, 0.0
    %v484 = vlaneseq
    %v485 = vshrl.u32 %v484, 7
    %v486 = vsub.s32 0, %v485
    %v487 = vrot.slane %v105, %v486
    %v488 = vlaneseq
    %v489 = vshrl.u32 %v488, 7
    %v490 = vsub.s32 1, %v489
    %v491 = vrot.slane %v105, %v490
    %v494 = vmul.f32 %v481, %v487
    %v495 = vmul.f32 %v482, %v491
    %v496 = vadd.f32 %v494, %v495
    %497 = vadd.xlane.f32.xlu0 %v496
    %v498 = vpop.xlane.xlu0 %497
    %v499 = vlaneseq
    %v500 = vshrl.u32 %v499, 7
    %v501 = vsub.s32 0, %v500
    %v502 = vrot.slane %v106, %v501
    %v503 = vadd.f32 %v498, %v502
    %vm504 = vcmask 7168
    %505 = vst.msk [vmem:[%s3] sm:$0xff] %vm504, %v503
    // Predicated region
    $region26: #{tpu_custom_call.1} parent=1 // pred_check
      _
    $region27: #{tpu_custom_call.1} parent=1 // pred_check_branch
      %507 = sbr.rel (0) target = $region29
    $region28: #{tpu_custom_call.1} parent=1 // pred_region
      _
    $region29: #{tpu_custom_call.1} parent=1 // pred_fallthru
      _
    // Predicated region
    $region30: #{tpu_custom_call.1} parent=1 // pred_check
      _
    $region31: #{tpu_custom_call.1} parent=1 // pred_check_branch
      %509 = sbr.rel (0) target = $region33
    $region32: #{tpu_custom_call.1} parent=1 // pred_region
      _
    $region33: #{tpu_custom_call.1} parent=1 // pred_fallthru
      _
    %510 = vsyncpa [#allocation3], 1
    %511 = vsyncpa [#allocation5], 1

</llo_original>
